<compile_context>
chip_gen: v7x
topology: tpu7x:2x2x1
jax: 0.10.0
libtpu: 0.0.40
codegen_flags: <defaults>
</compile_context>

<pallas_src>
import functools

import jax
import jax.numpy as jnp
from jax.experimental import pallas as pl
from jax.experimental.pallas import tpu as pltpu


H1, H2, H3 = 6, 6, 1  # layer widths of the ANN module


def _round_up(x, m):
    return (x + m - 1) // m * m


def _dense_vpu(w, b, a):
    """y[m, n] = sum_k w[m, k] * a[k, n] + b[m, 0] — unrolled VPU broadcast FMAs.

    w: (out, K) f32 (torch layout), b: (out, 1) f32, a: (K, TB) f32 -> (out, TB).
    K <= 8, so the MXU (and its push/pop latency) is skipped; everything stays
    in the vector-ALU slot with the batch on the 128 lanes.
    """
    out = w[:, 0:1] * a[0:1, :]
    for k in range(1, w.shape[1]):  # static unroll, K <= 8
        out = out + w[:, k : k + 1] * a[k : k + 1, :]
    return out + b


def _ann_kernel(xt_ref, w1_ref, b1_ref, w2_ref, b2_ref, w3_ref, b3_ref, o_ref):
    # x arrives batch-on-lanes and bf16; widen to f32 right after the load
    # (keeps all VPU math f32 -> correct and fast on v5e/v6e/v7x).
    x = xt_ref[...].astype(jnp.float32)                                # (F, TB)

    h1 = jnp.maximum(_dense_vpu(w1_ref[...], b1_ref[...], x), 0.0)     # (6, TB)
    h2 = jnp.maximum(_dense_vpu(w2_ref[...], b2_ref[...], h1), 0.0)    # (6, TB)
    z = _dense_vpu(w3_ref[...], b3_ref[...], h2)                       # (1, TB)

    # exp + reciprocal go to the EUP slot (otherwise idle in this kernel).
    o_ref[...] = jax.nn.sigmoid(z)


@functools.partial(jax.jit, static_argnames=("block_b",))
def ann_forward(x, params, *, block_b=1024):
    """Forward pass. x: (B, F) float; params hold torch-layout weights
    w{i}: (out, in) and column biases b{i}: (out, 1). Returns (B, 1) float32."""
    B, F = x.shape
    assert block_b % 128 == 0

    tb = min(block_b, _round_up(B, 128))   # lane tile (multiple of 128)
    Bp = _round_up(B, tb)                  # padded batch

    # Batch-on-lanes layout + bf16 storage (halves HBM bytes; f32 accum in-kernel).
    xt = jnp.zeros((F, Bp), jnp.bfloat16).at[:, :B].set(x.T.astype(jnp.bfloat16))

    w1, b1 = params["w1"], params["b1"]
    w2, b2 = params["w2"], params["b2"]
    w3, b3 = params["w3"], params["b3"]

    # Weights/biases: full-array blocks, constant index_map -> VMEM-resident.
    resident = lambda a: pl.BlockSpec(a.shape, lambda i, _nd=a.ndim: (0,) * _nd)

    out = pl.pallas_call(
        _ann_kernel,
        out_shape=jax.ShapeDtypeStruct((1, Bp), jnp.float32),
        grid=(Bp // tb,),
        in_specs=[
            pl.BlockSpec((F, tb), lambda i: (0, i)),       # x^T tiled over lanes
            resident(w1), resident(b1),
            resident(w2), resident(b2),
            resident(w3), resident(b3),
        ],
        out_specs=pl.BlockSpec((1, tb), lambda i: (0, i)),  # lane-dense output
        compiler_params=pltpu.CompilerParams(
            dimension_semantics=("parallel",),              # 2 TCs on v7x / megacore
        ),
    )(xt, w1, b1, w2, b2, w3, b3)

    # (1, Bp) -> (Bp, 1), drop padding.
    return out.reshape(Bp, 1)[:B]


def init_params(key, in_features):
    """Deterministic init mimicking torch.nn.Linear (uniform +/- 1/sqrt(fan_in)).
    Weights kept in torch layout (out, in); biases as (out, 1) columns."""
    dims = [(in_features, H1), (H1, H2), (H2, H3)]
    params = {}
    for i, (fan_in, fan_out) in enumerate(dims, start=1):
        key, kw, kb = jax.random.split(key, 3)
        bound = 1.0 / float(fan_in) ** 0.5
        params[f"w{i}"] = jax.random.uniform(
            kw, (fan_out, fan_in), jnp.float32, -bound, bound)
        params[f"b{i}"] = jax.random.uniform(
            kb, (fan_out, 1), jnp.float32, -bound, bound)
    return params


def reference_forward(x, params):
    lin = lambda a, w, b: jnp.dot(a, w.T, precision=jax.lax.Precision.HIGHEST) + b.T
    h1 = jnp.maximum(lin(x, params["w1"], params["b1"]), 0.0)
    h2 = jnp.maximum(lin(h1, params["w2"], params["b2"]), 0.0)
    return jax.nn.sigmoid(lin(h2, params["w3"], params["b3"]))


if __name__ == "__main__":
    key = jax.random.PRNGKey(0)
    key, kx = jax.random.split(key)

    B, F = 8, 8  # small batch; X_train.shape[1] := 8 features
    x = jax.random.normal(kx, (B, F), dtype=jnp.float32)  # standard-scaled-like
    params = init_params(key, F)

    out = jax.block_until_ready(ann_forward(x, params))

    # Kernel stores x as bf16 -> compare against a reference fed the same rounding.
    x_q = x.astype(jnp.bfloat16).astype(jnp.float32)
    ref = reference_forward(x_q, params)

    assert out.shape == (B, 1)
    assert jnp.allclose(out, ref, atol=1e-5, rtol=1e-5)

    print("KERNEL_OK")
</pallas_src>

<mosaic_0001>
module attributes {stable_mosaic.version = 11 : i64} {
  func.func @_ann_kernel(%arg0: i32, %arg1: memref<8x128xbf16, #tpu.memory_space<vmem>>, %arg2: memref<6x8xf32, #tpu.memory_space<vmem>>, %arg3: memref<6x1xf32, #tpu.memory_space<vmem>>, %arg4: memref<6x6xf32, #tpu.memory_space<vmem>>, %arg5: memref<6x1xf32, #tpu.memory_space<vmem>>, %arg6: memref<1x6xf32, #tpu.memory_space<vmem>>, %arg7: memref<1x1xf32, #tpu.memory_space<vmem>>, %arg8: memref<1x128xf32, #tpu.memory_space<vmem>>) attributes {dimension_semantics = [#tpu.dimension_semantics<parallel>], iteration_bounds = array<i64: 1>, scalar_prefetch = 0 : i64, scratch_operands = 0 : i64, tpu.core_type = #tpu.core_type<tc>, window_params = [{transform_indices = @transform_0, window_bounds = array<i64: 8, 128>}, {pipeline_mode = #tpu.pipeline_mode<synchronous>, transform_indices = @transform_1, window_bounds = array<i64: 6, 8>}, {pipeline_mode = #tpu.pipeline_mode<synchronous>, transform_indices = @transform_2, window_bounds = array<i64: 6, 1>}, {pipeline_mode = #tpu.pipeline_mode<synchronous>, transform_indices = @transform_3, window_bounds = array<i64: 6, 6>}, {pipeline_mode = #tpu.pipeline_mode<synchronous>, transform_indices = @transform_4, window_bounds = array<i64: 6, 1>}, {pipeline_mode = #tpu.pipeline_mode<synchronous>, transform_indices = @transform_5, window_bounds = array<i64: 1, 6>}, {pipeline_mode = #tpu.pipeline_mode<synchronous>, transform_indices = @transform_6, window_bounds = array<i64: 1, 1>}, {transform_indices = @transform_7, window_bounds = array<i64: 1, 128>}]} {
    %c0 = arith.constant 0 : index
    %c0_0 = arith.constant 0 : index
    %0 = vector.load %arg1[%c0, %c0_0] : memref<8x128xbf16, #tpu.memory_space<vmem>>, vector<8x128xbf16>
    %1 = arith.extf %0 : vector<8x128xbf16> to vector<8x128xf32>
    %c0_1 = arith.constant 0 : index
    %c0_2 = arith.constant 0 : index
    %2 = vector.load %arg2[%c0_1, %c0_2] : memref<6x8xf32, #tpu.memory_space<vmem>>, vector<6x8xf32>
    %c0_3 = arith.constant 0 : index
    %c0_4 = arith.constant 0 : index
    %3 = vector.load %arg3[%c0_3, %c0_4] : memref<6x1xf32, #tpu.memory_space<vmem>>, vector<6x1xf32>
    %4 = vector.extract_strided_slice %2 {offsets = [0, 0], sizes = [6, 1], strides = [1, 1]} : vector<6x8xf32> to vector<6x1xf32>
    %5 = vector.extract_strided_slice %1 {offsets = [0, 0], sizes = [1, 128], strides = [1, 1]} : vector<8x128xf32> to vector<1x128xf32>
    %6 = vector.broadcast %4 : vector<6x1xf32> to vector<6x128xf32>
    %7 = vector.broadcast %5 : vector<1x128xf32> to vector<6x128xf32>
    %8 = arith.mulf %6, %7 : vector<6x128xf32>
    %9 = vector.extract_strided_slice %2 {offsets = [0, 1], sizes = [6, 1], strides = [1, 1]} : vector<6x8xf32> to vector<6x1xf32>
    %10 = vector.extract_strided_slice %1 {offsets = [1, 0], sizes = [1, 128], strides = [1, 1]} : vector<8x128xf32> to vector<1x128xf32>
    %11 = vector.broadcast %9 : vector<6x1xf32> to vector<6x128xf32>
    %12 = vector.broadcast %10 : vector<1x128xf32> to vector<6x128xf32>
    %13 = arith.mulf %11, %12 : vector<6x128xf32>
    %14 = arith.addf %8, %13 : vector<6x128xf32>
    %15 = vector.extract_strided_slice %2 {offsets = [0, 2], sizes = [6, 1], strides = [1, 1]} : vector<6x8xf32> to vector<6x1xf32>
    %16 = vector.extract_strided_slice %1 {offsets = [2, 0], sizes = [1, 128], strides = [1, 1]} : vector<8x128xf32> to vector<1x128xf32>
    %17 = vector.broadcast %15 : vector<6x1xf32> to vector<6x128xf32>
    %18 = vector.broadcast %16 : vector<1x128xf32> to vector<6x128xf32>
    %19 = arith.mulf %17, %18 : vector<6x128xf32>
    %20 = arith.addf %14, %19 : vector<6x128xf32>
    %21 = vector.extract_strided_slice %2 {offsets = [0, 3], sizes = [6, 1], strides = [1, 1]} : vector<6x8xf32> to vector<6x1xf32>
    %22 = vector.extract_strided_slice %1 {offsets = [3, 0], sizes = [1, 128], strides = [1, 1]} : vector<8x128xf32> to vector<1x128xf32>
    %23 = vector.broadcast %21 : vector<6x1xf32> to vector<6x128xf32>
    %24 = vector.broadcast %22 : vector<1x128xf32> to vector<6x128xf32>
    %25 = arith.mulf %23, %24 : vector<6x128xf32>
    %26 = arith.addf %20, %25 : vector<6x128xf32>
    %27 = vector.extract_strided_slice %2 {offsets = [0, 4], sizes = [6, 1], strides = [1, 1]} : vector<6x8xf32> to vector<6x1xf32>
    %28 = vector.extract_strided_slice %1 {offsets = [4, 0], sizes = [1, 128], strides = [1, 1]} : vector<8x128xf32> to vector<1x128xf32>
    %29 = vector.broadcast %27 : vector<6x1xf32> to vector<6x128xf32>
    %30 = vector.broadcast %28 : vector<1x128xf32> to vector<6x128xf32>
    %31 = arith.mulf %29, %30 : vector<6x128xf32>
    %32 = arith.addf %26, %31 : vector<6x128xf32>
    %33 = vector.extract_strided_slice %2 {offsets = [0, 5], sizes = [6, 1], strides = [1, 1]} : vector<6x8xf32> to vector<6x1xf32>
    %34 = vector.extract_strided_slice %1 {offsets = [5, 0], sizes = [1, 128], strides = [1, 1]} : vector<8x128xf32> to vector<1x128xf32>
    %35 = vector.broadcast %33 : vector<6x1xf32> to vector<6x128xf32>
    %36 = vector.broadcast %34 : vector<1x128xf32> to vector<6x128xf32>
    %37 = arith.mulf %35, %36 : vector<6x128xf32>
    %38 = arith.addf %32, %37 : vector<6x128xf32>
    %39 = vector.extract_strided_slice %2 {offsets = [0, 6], sizes = [6, 1], strides = [1, 1]} : vector<6x8xf32> to vector<6x1xf32>
    %40 = vector.extract_strided_slice %1 {offsets = [6, 0], sizes = [1, 128], strides = [1, 1]} : vector<8x128xf32> to vector<1x128xf32>
    %41 = vector.broadcast %39 : vector<6x1xf32> to vector<6x128xf32>
    %42 = vector.broadcast %40 : vector<1x128xf32> to vector<6x128xf32>
    %43 = arith.mulf %41, %42 : vector<6x128xf32>
    %44 = arith.addf %38, %43 : vector<6x128xf32>
    %45 = vector.extract_strided_slice %2 {offsets = [0, 7], sizes = [6, 1], strides = [1, 1]} : vector<6x8xf32> to vector<6x1xf32>
    %46 = vector.extract_strided_slice %1 {offsets = [7, 0], sizes = [1, 128], strides = [1, 1]} : vector<8x128xf32> to vector<1x128xf32>
    %47 = vector.broadcast %45 : vector<6x1xf32> to vector<6x128xf32>
    %48 = vector.broadcast %46 : vector<1x128xf32> to vector<6x128xf32>
    %49 = arith.mulf %47, %48 : vector<6x128xf32>
    %50 = arith.addf %44, %49 : vector<6x128xf32>
    %51 = vector.broadcast %3 : vector<6x1xf32> to vector<6x128xf32>
    %52 = arith.addf %50, %51 : vector<6x128xf32>
    %cst = arith.constant 0.000000e+00 : f32
    %53 = vector.broadcast %cst : f32 to vector<6x128xf32>
    %54 = arith.maximumf %52, %53 : vector<6x128xf32>
    %c0_5 = arith.constant 0 : index
    %c0_6 = arith.constant 0 : index
    %55 = vector.load %arg4[%c0_5, %c0_6] : memref<6x6xf32, #tpu.memory_space<vmem>>, vector<6x6xf32>
    %c0_7 = arith.constant 0 : index
    %c0_8 = arith.constant 0 : index
    %56 = vector.load %arg5[%c0_7, %c0_8] : memref<6x1xf32, #tpu.memory_space<vmem>>, vector<6x1xf32>
    %57 = vector.extract_strided_slice %55 {offsets = [0, 0], sizes = [6, 1], strides = [1, 1]} : vector<6x6xf32> to vector<6x1xf32>
    %58 = vector.extract_strided_slice %54 {offsets = [0, 0], sizes = [1, 128], strides = [1, 1]} : vector<6x128xf32> to vector<1x128xf32>
    %59 = vector.broadcast %57 : vector<6x1xf32> to vector<6x128xf32>
    %60 = vector.broadcast %58 : vector<1x128xf32> to vector<6x128xf32>
    %61 = arith.mulf %59, %60 : vector<6x128xf32>
    %62 = vector.extract_strided_slice %55 {offsets = [0, 1], sizes = [6, 1], strides = [1, 1]} : vector<6x6xf32> to vector<6x1xf32>
    %63 = vector.extract_strided_slice %54 {offsets = [1, 0], sizes = [1, 128], strides = [1, 1]} : vector<6x128xf32> to vector<1x128xf32>
    %64 = vector.broadcast %62 : vector<6x1xf32> to vector<6x128xf32>
    %65 = vector.broadcast %63 : vector<1x128xf32> to vector<6x128xf32>
    %66 = arith.mulf %64, %65 : vector<6x128xf32>
    %67 = arith.addf %61, %66 : vector<6x128xf32>
    %68 = vector.extract_strided_slice %55 {offsets = [0, 2], sizes = [6, 1], strides = [1, 1]} : vector<6x6xf32> to vector<6x1xf32>
    %69 = vector.extract_strided_slice %54 {offsets = [2, 0], sizes = [1, 128], strides = [1, 1]} : vector<6x128xf32> to vector<1x128xf32>
    %70 = vector.broadcast %68 : vector<6x1xf32> to vector<6x128xf32>
    %71 = vector.broadcast %69 : vector<1x128xf32> to vector<6x128xf32>
    %72 = arith.mulf %70, %71 : vector<6x128xf32>
    %73 = arith.addf %67, %72 : vector<6x128xf32>
    %74 = vector.extract_strided_slice %55 {offsets = [0, 3], sizes = [6, 1], strides = [1, 1]} : vector<6x6xf32> to vector<6x1xf32>
    %75 = vector.extract_strided_slice %54 {offsets = [3, 0], sizes = [1, 128], strides = [1, 1]} : vector<6x128xf32> to vector<1x128xf32>
    %76 = vector.broadcast %74 : vector<6x1xf32> to vector<6x128xf32>
    %77 = vector.broadcast %75 : vector<1x128xf32> to vector<6x128xf32>
    %78 = arith.mulf %76, %77 : vector<6x128xf32>
    %79 = arith.addf %73, %78 : vector<6x128xf32>
    %80 = vector.extract_strided_slice %55 {offsets = [0, 4], sizes = [6, 1], strides = [1, 1]} : vector<6x6xf32> to vector<6x1xf32>
    %81 = vector.extract_strided_slice %54 {offsets = [4, 0], sizes = [1, 128], strides = [1, 1]} : vector<6x128xf32> to vector<1x128xf32>
    %82 = vector.broadcast %80 : vector<6x1xf32> to vector<6x128xf32>
    %83 = vector.broadcast %81 : vector<1x128xf32> to vector<6x128xf32>
    %84 = arith.mulf %82, %83 : vector<6x128xf32>
    %85 = arith.addf %79, %84 : vector<6x128xf32>
    %86 = vector.extract_strided_slice %55 {offsets = [0, 5], sizes = [6, 1], strides = [1, 1]} : vector<6x6xf32> to vector<6x1xf32>
    %87 = vector.extract_strided_slice %54 {offsets = [5, 0], sizes = [1, 128], strides = [1, 1]} : vector<6x128xf32> to vector<1x128xf32>
    %88 = vector.broadcast %86 : vector<6x1xf32> to vector<6x128xf32>
    %89 = vector.broadcast %87 : vector<1x128xf32> to vector<6x128xf32>
    %90 = arith.mulf %88, %89 : vector<6x128xf32>
    %91 = arith.addf %85, %90 : vector<6x128xf32>
    %92 = vector.broadcast %56 : vector<6x1xf32> to vector<6x128xf32>
    %93 = arith.addf %91, %92 : vector<6x128xf32>
    %cst_9 = arith.constant 0.000000e+00 : f32
    %94 = vector.broadcast %cst_9 : f32 to vector<6x128xf32>
    %95 = arith.maximumf %93, %94 : vector<6x128xf32>
    %c0_10 = arith.constant 0 : index
    %c0_11 = arith.constant 0 : index
    %96 = vector.load %arg6[%c0_10, %c0_11] : memref<1x6xf32, #tpu.memory_space<vmem>>, vector<1x6xf32>
    %c0_12 = arith.constant 0 : index
    %c0_13 = arith.constant 0 : index
    %97 = vector.load %arg7[%c0_12, %c0_13] : memref<1x1xf32, #tpu.memory_space<vmem>>, vector<1x1xf32>
    %98 = vector.extract_strided_slice %96 {offsets = [0, 0], sizes = [1, 1], strides = [1, 1]} : vector<1x6xf32> to vector<1x1xf32>
    %99 = vector.extract_strided_slice %95 {offsets = [0, 0], sizes = [1, 128], strides = [1, 1]} : vector<6x128xf32> to vector<1x128xf32>
    %100 = vector.broadcast %98 : vector<1x1xf32> to vector<1x128xf32>
    %101 = arith.mulf %100, %99 : vector<1x128xf32>
    %102 = vector.extract_strided_slice %96 {offsets = [0, 1], sizes = [1, 1], strides = [1, 1]} : vector<1x6xf32> to vector<1x1xf32>
    %103 = vector.extract_strided_slice %95 {offsets = [1, 0], sizes = [1, 128], strides = [1, 1]} : vector<6x128xf32> to vector<1x128xf32>
    %104 = vector.broadcast %102 : vector<1x1xf32> to vector<1x128xf32>
    %105 = arith.mulf %104, %103 : vector<1x128xf32>
    %106 = arith.addf %101, %105 : vector<1x128xf32>
    %107 = vector.extract_strided_slice %96 {offsets = [0, 2], sizes = [1, 1], strides = [1, 1]} : vector<1x6xf32> to vector<1x1xf32>
    %108 = vector.extract_strided_slice %95 {offsets = [2, 0], sizes = [1, 128], strides = [1, 1]} : vector<6x128xf32> to vector<1x128xf32>
    %109 = vector.broadcast %107 : vector<1x1xf32> to vector<1x128xf32>
    %110 = arith.mulf %109, %108 : vector<1x128xf32>
    %111 = arith.addf %106, %110 : vector<1x128xf32>
    %112 = vector.extract_strided_slice %96 {offsets = [0, 3], sizes = [1, 1], strides = [1, 1]} : vector<1x6xf32> to vector<1x1xf32>
    %113 = vector.extract_strided_slice %95 {offsets = [3, 0], sizes = [1, 128], strides = [1, 1]} : vector<6x128xf32> to vector<1x128xf32>
    %114 = vector.broadcast %112 : vector<1x1xf32> to vector<1x128xf32>
    %115 = arith.mulf %114, %113 : vector<1x128xf32>
    %116 = arith.addf %111, %115 : vector<1x128xf32>
    %117 = vector.extract_strided_slice %96 {offsets = [0, 4], sizes = [1, 1], strides = [1, 1]} : vector<1x6xf32> to vector<1x1xf32>
    %118 = vector.extract_strided_slice %95 {offsets = [4, 0], sizes = [1, 128], strides = [1, 1]} : vector<6x128xf32> to vector<1x128xf32>
    %119 = vector.broadcast %117 : vector<1x1xf32> to vector<1x128xf32>
    %120 = arith.mulf %119, %118 : vector<1x128xf32>
    %121 = arith.addf %116, %120 : vector<1x128xf32>
    %122 = vector.extract_strided_slice %96 {offsets = [0, 5], sizes = [1, 1], strides = [1, 1]} : vector<1x6xf32> to vector<1x1xf32>
    %123 = vector.extract_strided_slice %95 {offsets = [5, 0], sizes = [1, 128], strides = [1, 1]} : vector<6x128xf32> to vector<1x128xf32>
    %124 = vector.broadcast %122 : vector<1x1xf32> to vector<1x128xf32>
    %125 = arith.mulf %124, %123 : vector<1x128xf32>
    %126 = arith.addf %121, %125 : vector<1x128xf32>
    %127 = vector.broadcast %97 : vector<1x1xf32> to vector<1x128xf32>
    %128 = arith.addf %126, %127 : vector<1x128xf32>
    %129 = arith.negf %128 : vector<1x128xf32>
    %130 = math.exp %129 : vector<1x128xf32>
    %cst_14 = arith.constant 1.000000e+00 : f32
    %131 = vector.broadcast %cst_14 : f32 to vector<1x128xf32>
    %132 = arith.addf %131, %130 : vector<1x128xf32>
    %133 = arith.divf %131, %132 : vector<1x128xf32>
    %c0_15 = arith.constant 0 : index
    %c0_16 = arith.constant 0 : index
    %134 = vector.load %arg8[%c0_15, %c0_16] : memref<1x128xf32, #tpu.memory_space<vmem>>, vector<1x128xf32>
    tpu.vector_store %arg8[%c0_15, %c0_16], %133 {strides = array<i32>} : memref<1x128xf32, #tpu.memory_space<vmem>>, vector<1x128xf32>,
    return
  }
  func.func @transform_0(%arg0: i32) -> (i32, i32) {
    %c0_i32 = arith.constant 0 : i32
    %c0_i32_0 = arith.constant 0 : i32
    return %c0_i32, %arg0 : i32, i32
  }
  func.func @transform_1(%arg0: i32) -> (i32, i32) {
    %c0_i32 = arith.constant 0 : i32
    %c0_i32_0 = arith.constant 0 : i32
    %c0_i32_1 = arith.constant 0 : i32
    return %c0_i32, %c0_i32_0 : i32, i32
  }
  func.func @transform_2(%arg0: i32) -> (i32, i32) {
    %c0_i32 = arith.constant 0 : i32
    %c0_i32_0 = arith.constant 0 : i32
    %c0_i32_1 = arith.constant 0 : i32
    return %c0_i32, %c0_i32_0 : i32, i32
  }
  func.func @transform_3(%arg0: i32) -> (i32, i32) {
    %c0_i32 = arith.constant 0 : i32
    %c0_i32_0 = arith.constant 0 : i32
    %c0_i32_1 = arith.constant 0 : i32
    return %c0_i32, %c0_i32_0 : i32, i32
  }
  func.func @transform_4(%arg0: i32) -> (i32, i32) {
    %c0_i32 = arith.constant 0 : i32
    %c0_i32_0 = arith.constant 0 : i32
    %c0_i32_1 = arith.constant 0 : i32
    return %c0_i32, %c0_i32_0 : i32, i32
  }
  func.func @transform_5(%arg0: i32) -> (i32, i32) {
    %c0_i32 = arith.constant 0 : i32
    %c0_i32_0 = arith.constant 0 : i32
    %c0_i32_1 = arith.constant 0 : i32
    return %c0_i32, %c0_i32_0 : i32, i32
  }
  func.func @transform_6(%arg0: i32) -> (i32, i32) {
    %c0_i32 = arith.constant 0 : i32
    %c0_i32_0 = arith.constant 0 : i32
    %c0_i32_1 = arith.constant 0 : i32
    return %c0_i32, %c0_i32_0 : i32, i32
  }
  func.func @transform_7(%arg0: i32) -> (i32, i32) {
    %c0_i32 = arith.constant 0 : i32
    %c0_i32_0 = arith.constant 0 : i32
    return %c0_i32, %arg0 : i32, i32
  }
}

</mosaic_0001>

<llo_original>
// kernel: ann_forward.1
$region0: #{ann_forward.1}
  #allocation0 [shape = 'u32[]', space=smem, size = 0x4, offset = 0x4, fixed_abs, tag = 'smem constant byte address 0x4 - core index']
  #allocation1 [shape = 'u32[144,128]{1,0:T(1,128)}', space=vmem, size = 0x12000, scoped, tag = 'internal scratch']
  #allocation2 [shape = 'f32[1,1]{1,0:T(1,128)S(1)}', space=vmem, size = 0x200, scoped, tag = 'scoped memory for ann_forward.1']
  %s0 = inlined_call_operand.vmem [shape: bf16[8,128], index: 0, kind: input, shape index: {}]
  %s1 = inlined_call_operand.vmem [shape: f32[6,8], index: 1, kind: input, shape index: {}]
  %s2 = inlined_call_operand.vmem [shape: f32[6,1], index: 2, kind: input, shape index: {}]
  %s3 = inlined_call_operand.vmem [shape: f32[6,6], index: 3, kind: input, shape index: {}]
  %s4 = inlined_call_operand.vmem [shape: f32[6,1], index: 4, kind: input, shape index: {}]
  %s5 = inlined_call_operand.vmem [shape: f32[1,6], index: 5, kind: input, shape index: {}]
  %s6 = inlined_call_operand.<no memory space> [shape: f32[1,1], index: 6, kind: input, shape index: {}]
  %s7 = inlined_call_operand.vmem [shape: f32[1,128], index: 7, kind: output, shape index: {}]
  %s8 = sld [smem:[#allocation0]]
  $region38: #{ann_forward.1} parent=0
    _
  %s10 = ssub.s32 1, %s8
  %s11 = scalar_select 0, %s10, %s8
  %v12 = vstv %s6
  %13 = vst [vmem:[#allocation2] sm:$0x1] %v12
  // Predicated region
  $region2: #{ann_forward.1} parent=0 // pred_check
    _
  $region3: #{ann_forward.1} parent=0 // pred_check_branch
    %15 = sbr.rel (0) target = $region5
  $region4: #{ann_forward.1} parent=0 // pred_region
    _
  $region5: #{ann_forward.1} parent=0 // pred_fallthru
    _
  // Predicated region
  $region6: #{ann_forward.1} parent=0 // pred_check
    _
  $region7: #{ann_forward.1} parent=0 // pred_check_branch
    %17 = sbr.rel (0) target = $region9
  $region8: #{ann_forward.1} parent=0 // pred_region
    _
  $region9: #{ann_forward.1} parent=0 // pred_fallthru
    _
  // Predicated region
  $region10: #{ann_forward.1} parent=0 // pred_check
    _
  $region11: #{ann_forward.1} parent=0 // pred_check_branch
    %19 = sbr.rel (0) target = $region13
  $region12: #{ann_forward.1} parent=0 // pred_region
    _
  $region13: #{ann_forward.1} parent=0 // pred_fallthru
    _
  // Predicated region
  $region14: #{ann_forward.1} parent=0 // pred_check
    _
  $region15: #{ann_forward.1} parent=0 // pred_check_branch
    %21 = sbr.rel (0) target = $region17
  $region16: #{ann_forward.1} parent=0 // pred_region
    _
  $region17: #{ann_forward.1} parent=0 // pred_fallthru
    _
  // Predicated region
  $region18: #{ann_forward.1} parent=0 // pred_check
    _
  $region19: #{ann_forward.1} parent=0 // pred_check_branch
    %23 = sbr.rel (0) target = $region21
  $region20: #{ann_forward.1} parent=0 // pred_region
    _
  $region21: #{ann_forward.1} parent=0 // pred_fallthru
    _
  // Predicated region
  $region22: #{ann_forward.1} parent=0 // pred_check
    _
  $region23: #{ann_forward.1} parent=0 // pred_check_branch
    %25 = sbr.rel (0) target = $region25
  $region24: #{ann_forward.1} parent=0 // pred_region
    _
  $region25: #{ann_forward.1} parent=0 // pred_fallthru
    _
  // Predicated region
  $region26: #{ann_forward.1} parent=0 // pred_check
    _
  $region27: #{ann_forward.1} parent=0 // pred_check_branch
    %27 = sbr.rel (0) target = $region29
  $region28: #{ann_forward.1} parent=0 // pred_region
    _
  $region29: #{ann_forward.1} parent=0 // pred_fallthru
    _
  %v28 = vld [vmem:[%s0] sm:$0xf]
  %v29 = vunpack.c.l.bf16 %v28
  %v30 = vld [vmem:[%s1] sm:$0x3f]
  %v31 = vld [vmem:[%s2] sm:$0x3f]
  %33 = vset.pattern.permute.xlu0 0
  %34 = vperm.xlu0 %33, %v30
  %v35 = vpop.permute.xlu0 %34
  %v37 = vlaneseq
  %v38 = vshrl.u32 %v37, 7
  %v39 = vsub.s32 0, %v38
  %v40 = vrot.slane %v29, %v39
  %v41 = vmul.f32 %v35, %v40
  %42 = vset.pattern.permute.xlu0 1
  %43 = vperm.xlu0 %42, %v30
  %v44 = vpop.permute.xlu0 %43
  %v46 = vlaneseq
  %v47 = vshrl.u32 %v46, 7
  %v48 = vsub.s32 1, %v47
  %v49 = vrot.slane %v29, %v48
  %v50 = vmul.f32 %v44, %v49
  %v51 = vadd.f32 %v41, %v50
  %52 = vset.pattern.permute.xlu0 2
  %53 = vperm.xlu0 %52, %v30
  %v54 = vpop.permute.xlu0 %53
  %v56 = vlaneseq
  %v57 = vshrl.u32 %v56, 7
  %v58 = vsub.s32 2, %v57
  %v59 = vrot.slane %v29, %v58
  %v60 = vmul.f32 %v54, %v59
  %v61 = vadd.f32 %v51, %v60
  %62 = vset.pattern.permute.xlu0 3
  %63 = vperm.xlu0 %62, %v30
  %v64 = vpop.permute.xlu0 %63
  %v66 = vlaneseq
  %v67 = vshrl.u32 %v66, 7
  %v68 = vsub.s32 3, %v67
  %v69 = vrot.slane %v29, %v68
  %v70 = vmul.f32 %v64, %v69
  %v71 = vadd.f32 %v61, %v70
  %72 = vset.pattern.permute.xlu0 4
  %73 = vperm.xlu0 %72, %v30
  %v74 = vpop.permute.xlu0 %73
  %v76 = vlaneseq
  %v77 = vshrl.u32 %v76, 7
  %v78 = vsub.s32 4, %v77
  %v79 = vrot.slane %v29, %v78
  %v80 = vmul.f32 %v74, %v79
  %v81 = vadd.f32 %v71, %v80
  %82 = vset.pattern.permute.xlu0 5
  %83 = vperm.xlu0 %82, %v30
  %v84 = vpop.permute.xlu0 %83
  %v86 = vlaneseq
  %v87 = vshrl.u32 %v86, 7
  %v88 = vsub.s32 5, %v87
  %v89 = vrot.slane %v29, %v88
  %v90 = vmul.f32 %v84, %v89
  %v91 = vadd.f32 %v81, %v90
  %92 = vset.pattern.permute.xlu0 6
  %93 = vperm.xlu0 %92, %v30
  %v94 = vpop.permute.xlu0 %93
  %v96 = vlaneseq
  %v97 = vshrl.u32 %v96, 7
  %v98 = vsub.s32 6, %v97
  %v99 = vrot.slane %v29, %v98
  %v100 = vmul.f32 %v94, %v99
  %v101 = vadd.f32 %v91, %v100
  %102 = vset.pattern.permute.xlu0 7
  %103 = vperm.xlu0 %102, %v30
  %v104 = vpop.permute.xlu0 %103
  %v106 = vlaneseq
  %v107 = vshrl.u32 %v106, 7
  %v108 = vsub.s32 7, %v107
  %v109 = vrot.slane %v29, %v108
  %v110 = vmul.f32 %v104, %v109
  %v111 = vadd.f32 %v101, %v110
  %113 = vset.pattern.permute.xlu0 0
  %114 = vperm.xlu0 %113, %v31
  %v115 = vpop.permute.xlu0 %114
  %v117 = vadd.f32 %v111, %v115
  %v118 = vmax.f32 %v117, 0.0
  %v119 = vld [vmem:[%s3] sm:$0x3f]
  %v120 = vld [vmem:[%s4] sm:$0x3f]
  %122 = vset.pattern.permute.xlu0 0
  %123 = vperm.xlu0 %122, %v119
  %v124 = vpop.permute.xlu0 %123
  %v126 = vlaneseq
  %v127 = vshrl.u32 %v126, 7
  %v128 = vsub.s32 0, %v127
  %v129 = vrot.slane %v118, %v128
  %v130 = vmul.f32 %v124, %v129
  %131 = vset.pattern.permute.xlu0 1
  %132 = vperm.xlu0 %131, %v119
  %v133 = vpop.permute.xlu0 %132
  %v135 = vlaneseq
  %v136 = vshrl.u32 %v135, 7
  %v137 = vsub.s32 1, %v136
  %v138 = vrot.slane %v118, %v137
  %v139 = vmul.f32 %v133, %v138
  %v140 = vadd.f32 %v130, %v139
  %141 = vset.pattern.permute.xlu0 2
  %142 = vperm.xlu0 %141, %v119
  %v143 = vpop.permute.xlu0 %142
  %v145 = vlaneseq
  %v146 = vshrl.u32 %v145, 7
  %v147 = vsub.s32 2, %v146
  %v148 = vrot.slane %v118, %v147
  %v149 = vmul.f32 %v143, %v148
  %v150 = vadd.f32 %v140, %v149
  %151 = vset.pattern.permute.xlu0 3
  %152 = vperm.xlu0 %151, %v119
  %v153 = vpop.permute.xlu0 %152
  %v155 = vlaneseq
  %v156 = vshrl.u32 %v155, 7
  %v157 = vsub.s32 3, %v156
  %v158 = vrot.slane %v118, %v157
  %v159 = vmul.f32 %v153, %v158
  %v160 = vadd.f32 %v150, %v159
  %161 = vset.pattern.permute.xlu0 4
  %162 = vperm.xlu0 %161, %v119
  %v163 = vpop.permute.xlu0 %162
  %v165 = vlaneseq
  %v166 = vshrl.u32 %v165, 7
  %v167 = vsub.s32 4, %v166
  %v168 = vrot.slane %v118, %v167
  %v169 = vmul.f32 %v163, %v168
  %v170 = vadd.f32 %v160, %v169
  %171 = vset.pattern.permute.xlu0 5
  %172 = vperm.xlu0 %171, %v119
  %v173 = vpop.permute.xlu0 %172
  %v175 = vlaneseq
  %v176 = vshrl.u32 %v175, 7
  %v177 = vsub.s32 5, %v176
  %v178 = vrot.slane %v118, %v177
  %v179 = vmul.f32 %v173, %v178
  %v180 = vadd.f32 %v170, %v179
  %182 = vset.pattern.permute.xlu0 0
  %183 = vperm.xlu0 %182, %v120
  %v184 = vpop.permute.xlu0 %183
  %v186 = vadd.f32 %v180, %v184
  %v187 = vmax.f32 %v186, 0.0
  %v188 = vld [vmem:[%s5] sm:$0x1]
  %v189 = vld [vmem:[#allocation2] sm:$0x1]
  %191 = vset.pattern.permute.xlu0 0
  %192 = vperm.xlu0 %191, %v188
  %v193 = vpop.permute.xlu0 %192
  %v195 = vlaneseq
  %v196 = vshrl.u32 %v195, 7
  %v197 = vsub.s32 0, %v196
  %v198 = vrot.slane %v193, %v197
  %v199 = vmul.f32 %v198, %v187
  %200 = vset.pattern.permute.xlu0 1
  %201 = vperm.xlu0 %200, %v188
  %v202 = vpop.permute.xlu0 %201
  %v204 = vlaneseq
  %v205 = vshrl.u32 %v204, 7
  %v206 = vsub.s32 0, %v205
  %v207 = vrot.slane %v202, %v206
  %v208 = vmul.f32 %v207, %v187
  %v210 = vrot.slane %v208, 1
  %v212 = vadd.f32 %v199, %v210
  %213 = vset.pattern.permute.xlu0 2
  %214 = vperm.xlu0 %213, %v188
  %v215 = vpop.permute.xlu0 %214
  %v217 = vlaneseq
  %v218 = vshrl.u32 %v217, 7
  %v219 = vsub.s32 0, %v218
  %v220 = vrot.slane %v215, %v219
  %v221 = vmul.f32 %v220, %v187
  %v223 = vrot.slane %v221, 2
  %v225 = vadd.f32 %v212, %v223
  %226 = vset.pattern.permute.xlu0 3
  %227 = vperm.xlu0 %226, %v188
  %v228 = vpop.permute.xlu0 %227
  %v230 = vlaneseq
  %v231 = vshrl.u32 %v230, 7
  %v232 = vsub.s32 0, %v231
  %v233 = vrot.slane %v228, %v232
  %v234 = vmul.f32 %v233, %v187
  %v236 = vrot.slane %v234, 3
  %v238 = vadd.f32 %v225, %v236
  %239 = vset.pattern.permute.xlu0 4
  %240 = vperm.xlu0 %239, %v188
  %v241 = vpop.permute.xlu0 %240
  %v243 = vlaneseq
  %v244 = vshrl.u32 %v243, 7
  %v245 = vsub.s32 0, %v244
  %v246 = vrot.slane %v241, %v245
  %v247 = vmul.f32 %v246, %v187
  %v249 = vrot.slane %v247, 4
  %v251 = vadd.f32 %v238, %v249
  %252 = vset.pattern.permute.xlu0 5
  %253 = vperm.xlu0 %252, %v188
  %v254 = vpop.permute.xlu0 %253
  %v256 = vlaneseq
  %v257 = vshrl.u32 %v256, 7
  %v258 = vsub.s32 0, %v257
  %v259 = vrot.slane %v254, %v258
  %v260 = vmul.f32 %v259, %v187
  %v262 = vrot.slane %v260, 5
  %v264 = vadd.f32 %v251, %v262
  %266 = vset.pattern.permute.xlu0 0
  %267 = vperm.xlu0 %266, %v189
  %v268 = vpop.permute.xlu0 %267
  %v270 = vlaneseq
  %v271 = vshrl.u32 %v270, 7
  %v272 = vsub.s32 0, %v271
  %v273 = vrot.slane %v268, %v272
  %v274 = vadd.f32 %v264, %v273
  %v275 = vxor.u32 %v274, 2147483648
  %v276 = vmul.f32 %v275, 1.442695
  %v277 = vpow.pop %v276
  %v278 = vadd.f32 %v277, 1.0
  %v279 = vrcp.pop %v278
  %v280 = vmul.f32 1.0, %v279
  %281 = vst [vmem:[%s7] sm:$0x1] %v280
  // Predicated region
  $region30: #{ann_forward.1} parent=0 // pred_check
    _
  $region31: #{ann_forward.1} parent=0 // pred_check_branch
    %283 = sbr.rel (0) target = $region33
  $region32: #{ann_forward.1} parent=0 // pred_region
    _
  $region33: #{ann_forward.1} parent=0 // pred_fallthru
    _
  // Predicated region
  $region34: #{ann_forward.1} parent=0 // pred_check
    _
  $region35: #{ann_forward.1} parent=0 // pred_check_branch
    %285 = sbr.rel (0) target = $region37
  $region36: #{ann_forward.1} parent=0 // pred_region
    _
  $region37: #{ann_forward.1} parent=0 // pred_fallthru
    _

</llo_original>
